<compile_context>
chip_gen: v6e
topology: v6e:2x2x1
jax: 0.10.0
libtpu: 0.0.40
codegen_flags: <defaults>
</compile_context>

<pallas_src>
import functools

import jax
import jax.numpy as jnp
import numpy as np
from jax.experimental import pallas as pl
from jax.experimental.pallas import tpu as pltpu


def _sdpa_kernel(q_ref, k_ref, v_ref, o_ref, *, scale):
    # q_ref: (R, d_k)        R = B*H*Lq rows packed on the sublane axis
    # k_ref: (Lk, R, d_k)    key position is the leading (unrolled) axis
    # v_ref: (Lk, R, d_v)
    # o_ref: (R, d_v)
    lk = k_ref.shape[0]

    # Fold 1/sqrt(d_k) into Q once (single vreg multiply; kept in-kernel —
    # a wrapper-side pre-scale would just be a separate un-hidden XLA op).
    q = q_ref[...].astype(jnp.float32) * scale                     # (R, d_k)

    # scores_j[r] = <q_r, k_{j,r}>  — VPU multiply + lane reduction (XLU),
    # no MXU, no K transpose.  Lk is tiny, so the Python loop is a static
    # unroll over contiguous (R, d_k) tiles.
    s = [jnp.sum(q * k_ref[j].astype(jnp.float32), axis=-1, keepdims=True)
         for j in range(lk)]                                       # Lk x (R, 1)

    # Numerically stable softmax across the Lk columns, kept as separate
    # (R, 1) columns (no narrow (R, Lk) tile is ever materialized).
    m = s[0]
    for j in range(1, lk):
        m = jnp.maximum(m, s[j])
    e = [jnp.exp(sj - m) for sj in s]                              # Lk x (R, 1)
    denom = e[0]
    for j in range(1, lk):
        denom = denom + e[j]
    inv = pl.reciprocal(denom, approx=True)                        # EUP vrcp

    # Unnormalized context = sum_j e_j * V_j, then one normalization multiply
    # at the end (fewer VPU broadcast-multiplies than weighting each term by
    # e_j * inv).
    ctx = e[0] * v_ref[0].astype(jnp.float32)
    for j in range(1, lk):
        ctx = ctx + e[j] * v_ref[j].astype(jnp.float32)            # (R, d_v)
    ctx = ctx * inv

    o_ref[...] = ctx.astype(o_ref.dtype)


def scaled_dot_product_attention(Q, K, V):
    """Q: (B,H,Lq,d_k), K: (B,H,Lk,d_k), V: (B,H,Lk,d_v) -> (B,H,Lq,d_v)."""
    B, H, Lq, d_k = Q.shape
    _, _, Lk, _ = K.shape
    d_v = V.shape[-1]
    R = B * H * Lq
    scale = float(1.0 / np.sqrt(d_k))

    # Pure layout plumbing, outside the kernel: pack all (b, h, lq) rows onto
    # the sublane axis; make the key position the leading axis of K/V so each
    # k_ref[j] / v_ref[j] is a contiguous (R, d) tile.  For the module's
    # Lq == 1 the broadcast over Lq is a no-op.
    Qf = Q.reshape(R, d_k)
    Kt = jnp.moveaxis(
        jnp.broadcast_to(K[:, :, None, :, :], (B, H, Lq, Lk, d_k)).reshape(R, Lk, d_k),
        1, 0)                                                      # (Lk, R, d_k)
    Vt = jnp.moveaxis(
        jnp.broadcast_to(V[:, :, None, :, :], (B, H, Lq, Lk, d_v)).reshape(R, Lk, d_v),
        1, 0)                                                      # (Lk, R, d_v)

    kernel = functools.partial(_sdpa_kernel, scale=scale)
    vmem = pltpu.MemorySpace.VMEM

    out = pl.pallas_call(
        kernel,
        out_shape=jax.ShapeDtypeStruct((R, d_v), Q.dtype),
        # No grid: a single step with whole arrays resident in VMEM.
        in_specs=[pl.BlockSpec(memory_space=vmem)] * 3,
        out_specs=pl.BlockSpec(memory_space=vmem),
    )(Qf, Kt, Vt)

    # Undo the packing: rows were laid out in (b, h, lq) order.
    return out.reshape(B, H, Lq, d_v)


def _reference(Q, K, V):
    d_k = Q.shape[-1]
    scores = jnp.einsum("bhqd,bhkd->bhqk", Q, K) / np.sqrt(d_k)
    attn = jax.nn.softmax(scores, axis=-1)
    return jnp.einsum("bhqk,bhkv->bhqv", attn, V)


if __name__ == "__main__":
    # Small shapes consistent with the module's forward docstring.
    B, H, Lq, Lk, d_k, d_v = 2, 4, 1, 3, 32, 32

    key = jax.random.PRNGKey(0)
    kq, kk, kv = jax.random.split(key, 3)
    Q = jax.random.normal(kq, (B, H, Lq, d_k), dtype=jnp.float32)
    K = jax.random.normal(kk, (B, H, Lk, d_k), dtype=jnp.float32)
    V = jax.random.normal(kv, (B, H, Lk, d_v), dtype=jnp.float32)

    out = scaled_dot_product_attention(Q, K, V)
    jax.block_until_ready(out)

    ref = _reference(Q, K, V)
    # Tolerance accounts for the EUP approximate reciprocal in the softmax.
    np.testing.assert_allclose(np.asarray(out), np.asarray(ref), rtol=2e-3, atol=2e-3)

    print("KERNEL_OK")
</pallas_src>

<mosaic_0001>
module attributes {stable_mosaic.version = 11 : i64} {
  func.func @_sdpa_kernel(%arg0: memref<8x32xf32, #tpu.memory_space<vmem>>, %arg1: memref<3x8x32xf32, #tpu.memory_space<vmem>>, %arg2: memref<3x8x32xf32, #tpu.memory_space<vmem>>, %arg3: memref<8x32xf32, #tpu.memory_space<vmem>>) attributes {dimension_semantics = [], scalar_prefetch = 0 : i64, scratch_operands = 0 : i64, tpu.core_type = #tpu.core_type<tc>} {
    %c0 = arith.constant 0 : index
    %c0_0 = arith.constant 0 : index
    %0 = vector.load %arg0[%c0, %c0_0] : memref<8x32xf32, #tpu.memory_space<vmem>>, vector<8x32xf32>
    %cst = arith.constant 0.176776692 : f32
    %1 = vector.broadcast %cst : f32 to vector<8x32xf32>
    %2 = arith.mulf %0, %1 : vector<8x32xf32>
    %c0_1 = arith.constant 0 : index
    %c0_2 = arith.constant 0 : index
    %c0_3 = arith.constant 0 : index
    %3 = vector.load %arg1[%c0_1, %c0_2, %c0_3] : memref<3x8x32xf32, #tpu.memory_space<vmem>>, vector<1x8x32xf32>
    %4 = vector.shape_cast %3 : vector<1x8x32xf32> to vector<8x32xf32>
    %5 = arith.mulf %2, %4 : vector<8x32xf32>
    %cst_4 = arith.constant dense<0.000000e+00> : vector<8xf32>
    %6 = vector.multi_reduction <add>, %5, %cst_4 [1] : vector<8x32xf32> to vector<8xf32>
    %7 = vector.shape_cast %6 : vector<8xf32> to vector<8x1xf32>
    %c1 = arith.constant 1 : index
    %c0_5 = arith.constant 0 : index
    %c0_6 = arith.constant 0 : index
    %8 = vector.load %arg1[%c1, %c0_5, %c0_6] : memref<3x8x32xf32, #tpu.memory_space<vmem>>, vector<1x8x32xf32>
    %9 = vector.shape_cast %8 : vector<1x8x32xf32> to vector<8x32xf32>
    %10 = arith.mulf %2, %9 : vector<8x32xf32>
    %cst_7 = arith.constant dense<0.000000e+00> : vector<8xf32>
    %11 = vector.multi_reduction <add>, %10, %cst_7 [1] : vector<8x32xf32> to vector<8xf32>
    %12 = vector.shape_cast %11 : vector<8xf32> to vector<8x1xf32>
    %c2 = arith.constant 2 : index
    %c0_8 = arith.constant 0 : index
    %c0_9 = arith.constant 0 : index
    %13 = vector.load %arg1[%c2, %c0_8, %c0_9] : memref<3x8x32xf32, #tpu.memory_space<vmem>>, vector<1x8x32xf32>
    %14 = vector.shape_cast %13 : vector<1x8x32xf32> to vector<8x32xf32>
    %15 = arith.mulf %2, %14 : vector<8x32xf32>
    %cst_10 = arith.constant dense<0.000000e+00> : vector<8xf32>
    %16 = vector.multi_reduction <add>, %15, %cst_10 [1] : vector<8x32xf32> to vector<8xf32>
    %17 = vector.shape_cast %16 : vector<8xf32> to vector<8x1xf32>
    %18 = arith.maximumf %7, %12 : vector<8x1xf32>
    %19 = arith.maximumf %18, %17 : vector<8x1xf32>
    %20 = arith.subf %7, %19 : vector<8x1xf32>
    %21 = math.exp %20 : vector<8x1xf32>
    %22 = arith.subf %12, %19 : vector<8x1xf32>
    %23 = math.exp %22 : vector<8x1xf32>
    %24 = arith.subf %17, %19 : vector<8x1xf32>
    %25 = math.exp %24 : vector<8x1xf32>
    %26 = arith.addf %21, %23 : vector<8x1xf32>
    %27 = arith.addf %26, %25 : vector<8x1xf32>
    %28 = tpu.reciprocal %27 {approx = true} : vector<8x1xf32> -> vector<8x1xf32>
    %c0_11 = arith.constant 0 : index
    %c0_12 = arith.constant 0 : index
    %c0_13 = arith.constant 0 : index
    %29 = vector.load %arg2[%c0_11, %c0_12, %c0_13] : memref<3x8x32xf32, #tpu.memory_space<vmem>>, vector<1x8x32xf32>
    %30 = vector.shape_cast %29 : vector<1x8x32xf32> to vector<8x32xf32>
    %31 = vector.broadcast %21 : vector<8x1xf32> to vector<8x32xf32>
    %32 = arith.mulf %31, %30 : vector<8x32xf32>
    %c1_14 = arith.constant 1 : index
    %c0_15 = arith.constant 0 : index
    %c0_16 = arith.constant 0 : index
    %33 = vector.load %arg2[%c1_14, %c0_15, %c0_16] : memref<3x8x32xf32, #tpu.memory_space<vmem>>, vector<1x8x32xf32>
    %34 = vector.shape_cast %33 : vector<1x8x32xf32> to vector<8x32xf32>
    %35 = vector.broadcast %23 : vector<8x1xf32> to vector<8x32xf32>
    %36 = arith.mulf %35, %34 : vector<8x32xf32>
    %37 = arith.addf %32, %36 : vector<8x32xf32>
    %c2_17 = arith.constant 2 : index
    %c0_18 = arith.constant 0 : index
    %c0_19 = arith.constant 0 : index
    %38 = vector.load %arg2[%c2_17, %c0_18, %c0_19] : memref<3x8x32xf32, #tpu.memory_space<vmem>>, vector<1x8x32xf32>
    %39 = vector.shape_cast %38 : vector<1x8x32xf32> to vector<8x32xf32>
    %40 = vector.broadcast %25 : vector<8x1xf32> to vector<8x32xf32>
    %41 = arith.mulf %40, %39 : vector<8x32xf32>
    %42 = arith.addf %37, %41 : vector<8x32xf32>
    %43 = vector.broadcast %28 : vector<8x1xf32> to vector<8x32xf32>
    %44 = arith.mulf %42, %43 : vector<8x32xf32>
    %c0_20 = arith.constant 0 : index
    %c0_21 = arith.constant 0 : index
    %45 = vector.load %arg3[%c0_20, %c0_21] : memref<8x32xf32, #tpu.memory_space<vmem>>, vector<8x32xf32>
    tpu.vector_store %arg3[%c0_20, %c0_21], %44 {strides = array<i32>} : memref<8x32xf32, #tpu.memory_space<vmem>>, vector<8x32xf32>,
    return
  }
}

</mosaic_0001>

<llo_original>
// kernel: tpu_custom_call.1
$region0: #{tpu_custom_call.1}
  #allocation0 [shape = 'u32[]', space=smem, size = 0x4, offset = 0x4, fixed_abs, tag = 'smem constant byte address 0x4 - core index']
  #allocation1 [shape = 'u32[144,128]{1,0:T(1,128)}', space=vmem, size = 0x12000, scoped, tag = 'internal scratch']
  %s0 = inlined_call_operand.hbm [shape: f32[8,32], index: 0, kind: input, shape index: {}]
  %s1 = inlined_call_operand.hbm [shape: f32[3,8,32], index: 1, kind: input, shape index: {}]
  %s2 = inlined_call_operand.hbm [shape: f32[3,8,32], index: 2, kind: input, shape index: {}]
  %s3 = inlined_call_operand.hbm [shape: f32[8,32], index: 3, kind: output, shape index: {}]
  %s4 = sld [smem:[#allocation0]]
  $region34: #{tpu_custom_call.1} parent=0
    _
  %s6 = ssub.s32 1, %s4
  %s7 = scalar_select 0, %s6, %s4
  $region1: #{tpu_custom_call.1} parent=0
    #allocation2 [shape = 'u8[4096]{0}', space=vmem, size = 0x1000, scoped, tag = 'input window, operand 0, single buffered']
    #allocation3 [shape = 's32[1]{0}', space=sflag, size = 0x4, scoped, tag = 'scoped memory for tpu_custom_call.1']
    #allocation4 [shape = 's32[1]{0}', space=sflag, size = 0x4, scoped, tag = 'scoped memory for tpu_custom_call.1']
    #allocation5 [shape = 'u8[12288]{0}', space=vmem, size = 0x3000, scoped, tag = 'input window, operand 1, single buffered']
    #allocation6 [shape = 's32[1]{0}', space=sflag, size = 0x4, scoped, tag = 'scoped memory for tpu_custom_call.1']
    #allocation7 [shape = 'u8[12288]{0}', space=vmem, size = 0x3000, scoped, tag = 'input window, operand 2, single buffered']
    #allocation8 [shape = 'u8[4096]{0}', space=vmem, size = 0x1000, scoped, tag = 'output window, operand 0, single buffered']
    %8 = vsyncpa [#allocation3], 0
    %9 = vsyncpa [#allocation6], 0
    %10 = vsyncpa [#allocation4], 0
    // Predicated region
    $region2: #{tpu_custom_call.1} parent=1 // pred_check
      _
    $region3: #{tpu_custom_call.1} parent=1 // pred_check_branch
      %12 = sbr.rel (0) target = $region5
    $region4: #{tpu_custom_call.1} parent=1 // pred_region
      %s14 = ssub.s32 128, 128
      %15 = vsyncadd [#allocation3], %s14
      %s17 = sshll.u32 [#allocation2], 4
      %s18 = int_to_ptr.vmem [resolvable:$true] %s17
      %20 = dma.hbm_to_vmem [thread:$0]  %s0, 128, %s18, [#allocation3]
    $region5: #{tpu_custom_call.1} parent=1 // pred_fallthru
      _
    // Predicated region
    $region6: #{tpu_custom_call.1} parent=1 // pred_check
      _
    $region7: #{tpu_custom_call.1} parent=1 // pred_check_branch
      %22 = sbr.rel (0) target = $region9
    $region8: #{tpu_custom_call.1} parent=1 // pred_region
      %s24 = ssub.s32 384, 384
      %25 = vsyncadd [#allocation6], %s24
      %s26 = sshll.u32 [#allocation5], 4
      %s27 = int_to_ptr.vmem [resolvable:$true] %s26
      %32 = dma.hbm_to_vmem [thread:$0]  %s1, 384, %s27, [#allocation6], 128, 128, 8
    $region9: #{tpu_custom_call.1} parent=1 // pred_fallthru
      _
    // Predicated region
    $region10: #{tpu_custom_call.1} parent=1 // pred_check
      _
    $region11: #{tpu_custom_call.1} parent=1 // pred_check_branch
      %34 = sbr.rel (0) target = $region13
    $region12: #{tpu_custom_call.1} parent=1 // pred_region
      %s36 = ssub.s32 384, 384
      %37 = vsyncadd [#allocation6], %s36
      %s38 = sshll.u32 [#allocation7], 4
      %s39 = int_to_ptr.vmem [resolvable:$true] %s38
      %44 = dma.hbm_to_vmem [thread:$0]  %s2, 384, %s39, [#allocation6], 128, 128, 8
    $region13: #{tpu_custom_call.1} parent=1 // pred_fallthru
      _
    // Predicated region
    $region14: #{tpu_custom_call.1} parent=1 // pred_check
      _
    $region15: #{tpu_custom_call.1} parent=1 // pred_check_branch
      %46 = sbr.rel (0) target = $region17
    $region16: #{tpu_custom_call.1} parent=1 // pred_region
      %47 = dma.done [#allocation3], 128
    $region17: #{tpu_custom_call.1} parent=1 // pred_fallthru
      _
    // Predicated region
    $region18: #{tpu_custom_call.1} parent=1 // pred_check
      _
    $region19: #{tpu_custom_call.1} parent=1 // pred_check_branch
      %49 = sbr.rel (0) target = $region21
    $region20: #{tpu_custom_call.1} parent=1 // pred_region
      %50 = dma.done [#allocation6], 384
    $region21: #{tpu_custom_call.1} parent=1 // pred_fallthru
      _
    // Predicated region
    $region22: #{tpu_custom_call.1} parent=1 // pred_check
      _
    $region23: #{tpu_custom_call.1} parent=1 // pred_check_branch
      %52 = sbr.rel (0) target = $region25
    $region24: #{tpu_custom_call.1} parent=1 // pred_region
      %53 = dma.done [#allocation6], 384
    $region25: #{tpu_custom_call.1} parent=1 // pred_fallthru
      _
    %v54 = vld [vmem:[#allocation2] sm:$0xff]
    %v55 = vmul.f32 %v54, 0.17677669
    %v56 = vld [vmem:[#allocation5] sm:$0xff]
    %v57 = vmul.f32 %v55, %v56
    %vm58 = vcmask 261120
    %v59 = vsel %vm58, %v57, 0.0
    %60 = vadd.xlane.f32.xlu0 %v59
    %v61 = vpop.xlane.xlu0 %60
    %s62 = scalar_lea.vmem [#allocation5], 8
    %v63 = vld [vmem:[%s62] sm:$0xff]
    %v64 = vmul.f32 %v55, %v63
    %v65 = vsel %vm58, %v64, 0.0
    %66 = vadd.xlane.f32.xlu0 %v65
    %v67 = vpop.xlane.xlu0 %66
    %s68 = scalar_lea.vmem [#allocation5], 16
    %v69 = vld [vmem:[%s68] sm:$0xff]
    %v70 = vmul.f32 %v55, %v69
    %v71 = vsel %vm58, %v70, 0.0
    %72 = vadd.xlane.f32.xlu0 %v71
    %v73 = vpop.xlane.xlu0 %72
    %v74 = vmax.f32 %v61, %v67
    %v75 = vmax.f32 %v74, %v73
    %v76 = vsub.f32 %v61, %v75
    %v77 = vmul.f32 %v76, 1.442695
    %v78 = vpow.pop %v77
    %v79 = vsub.f32 %v67, %v75
    %v80 = vmul.f32 %v79, 1.442695
    %v81 = vpow.pop %v80
    %v82 = vsub.f32 %v73, %v75
    %v83 = vmul.f32 %v82, 1.442695
    %v84 = vpow.pop %v83
    %v85 = vadd.f32 %v78, %v81
    %v86 = vadd.f32 %v85, %v84
    %v87 = vrcp.pop %v86
    %v88 = vld [vmem:[#allocation7] sm:$0xff]
    %v89 = vmul.f32 %v78, %v88
    %s90 = scalar_lea.vmem [#allocation7], 8
    %v91 = vld [vmem:[%s90] sm:$0xff]
    %v92 = vmul.f32 %v81, %v91
    %v93 = vadd.f32 %v89, %v92
    %s94 = scalar_lea.vmem [#allocation7], 16
    %v95 = vld [vmem:[%s94] sm:$0xff]
    %v96 = vmul.f32 %v84, %v95
    %v97 = vadd.f32 %v93, %v96
    %v98 = vmul.f32 %v97, %v87
    %99 = vst.msk [vmem:[#allocation8] sm:$0xff] %vm58, %v98
    // Predicated region
    $region26: #{tpu_custom_call.1} parent=1 // pred_check
      _
    $region27: #{tpu_custom_call.1} parent=1 // pred_check_branch
      %101 = sbr.rel (0) target = $region29
    $region28: #{tpu_custom_call.1} parent=1 // pred_region
      %s103 = ssub.s32 128, 128
      %104 = vsyncadd [#allocation4], %s103
      %s106 = sshll.u32 [#allocation8], 4
      %s107 = int_to_ptr.vmem [resolvable:$true] %s106
      %109 = dma.vmem_to_hbm [thread:$0]  %s107, 128, %s3, [#allocation4]
    $region29: #{tpu_custom_call.1} parent=1 // pred_fallthru
      _
    // Predicated region
    $region30: #{tpu_custom_call.1} parent=1 // pred_check
      _
    $region31: #{tpu_custom_call.1} parent=1 // pred_check_branch
      %111 = sbr.rel (0) target = $region33
    $region32: #{tpu_custom_call.1} parent=1 // pred_region
      %112 = dma.done [#allocation4], 128
    $region33: #{tpu_custom_call.1} parent=1 // pred_fallthru
      _
    %113 = vsyncpa [#allocation3], 1
    %114 = vsyncpa [#allocation6], 1
    %115 = vsyncpa [#allocation4], 1

</llo_original>
